<compile_context>
chip_gen: v6e
topology: v6e:2x2x1
jax: 0.10.0
libtpu: 0.0.40
codegen_flags: <defaults>
</compile_context>

<pallas_src>
import functools

import jax
import jax.numpy as jnp
from jax.experimental import pallas as pl
from jax.experimental.pallas import tpu as pltpu

LANE = 128
SUBLANE = 8
TARGET_TILE_ROWS = 2048  # 2048 x 128 x 4B = 1 MiB per f32 input block


def _l2_partial_kernel(x_ref, y_ref, *out_refs, tile_r, num_blocks, use_weight,
                       ragged, full_rows, rem):
    """Per-block partial sums of (x - y)^2 [* w] and (optionally) w.

    Each grid step writes its own (SUBLANE, LANE) partial-sum slab, so the
    grid axis carries no dependency and can be "parallel" (megacore / v7x
    dual-TC friendly).  Raggedness (partial last block / lane padding) is
    masked only on the last block.
    """
    i = pl.program_id(0)

    xb = x_ref[...].astype(jnp.float32)
    yb = y_ref[...].astype(jnp.float32)
    diff = xb - yb
    sq = diff * diff

    if use_weight:
        num_out, den_out = out_refs
        # exact reciprocal (approx=True would route to EUP but loosens the
        # 1e-5 tolerance margin; this kernel is HBM-bound anyway).
        w = 1.0 / (yb + 0.25)
        num_t = sq * w
        den_t = w
    else:
        (num_out,) = out_refs
        num_t = sq
        den_t = None

    def fold(v):
        # (tile_r, LANE) -> (tile_r//8, 8, LANE) is a layout-preserving
        # reshape; summing the leading axis is pure VPU vreg adds, leaving the
        # cross-lane/sublane reduction to the (tiny) glue-side sum.
        return v.reshape(tile_r // SUBLANE, SUBLANE, LANE).sum(axis=0)

    def write(apply_mask):
        nt, dt = num_t, den_t
        if apply_mask:
            grow = i * tile_r + jax.lax.broadcasted_iota(
                jnp.int32, (tile_r, LANE), 0)
            valid = grow < full_rows
            if rem:
                col = jax.lax.broadcasted_iota(jnp.int32, (tile_r, LANE), 1)
                valid = valid | ((grow == full_rows) & (col < rem))
            # Use where (not multiply): rows past the array end are
            # uninitialized VMEM and may hold NaN/Inf garbage.
            nt = jnp.where(valid, nt, 0.0)
            if use_weight:
                dt = jnp.where(valid, dt, 0.0)
        num_out[...] = fold(nt)
        if use_weight:
            den_out[...] = fold(dt)

    if not ragged:
        write(False)
    elif num_blocks == 1:
        write(True)
    else:
        last = num_blocks - 1

        @pl.when(i != last)
        def _():
            write(False)

        @pl.when(i == last)
        def _():
            write(True)


def l2_loss(x, y, *, use_weight=False):
    """Pallas equivalent of L2Loss.forward (scalar f32 output)."""
    assert x.shape == y.shape, "prediction/label shape mismatch"
    n_batch = y.shape[0]
    total = int(x.size)

    xf = x.reshape(-1)   # keep original dtype; kernel upcasts on the VPU
    yf = y.reshape(-1)

    full_rows = total // LANE
    rem = total % LANE

    # Pad only when the flat size is not a multiple of one (8,128) slab; for
    # aligned inputs the reshape below is a zero-copy view, so large arrays
    # are never copied in HBM just to add padding.
    slab = LANE * SUBLANE
    padded = pl.cdiv(total, slab) * slab
    if padded != total:
        xf = jnp.pad(xf, (0, padded - total))
        yf = jnp.pad(yf, (0, padded - total))
    rows = padded // LANE

    x2 = xf.reshape(rows, LANE)
    y2 = yf.reshape(rows, LANE)

    # rows is a multiple of 8, so tile_r is too.  ~1 MiB per f32 input block;
    # 2 inputs x 2 pipeline buffers ~= 4 MiB -> fits every chip's default
    # scoped VMEM (including v5e's 16 MiB), no vmem_limit override required.
    tile_r = min(TARGET_TILE_ROWS, rows)
    num_blocks = pl.cdiv(rows, tile_r)
    ragged = (num_blocks * tile_r * LANE) != total

    kernel = functools.partial(
        _l2_partial_kernel,
        tile_r=tile_r,
        num_blocks=num_blocks,
        use_weight=use_weight,
        ragged=ragged,
        full_rows=full_rows,
        rem=rem,
    )

    out_rows = num_blocks * SUBLANE
    out_shape = [jax.ShapeDtypeStruct((out_rows, LANE), jnp.float32)]
    out_specs = [pl.BlockSpec((SUBLANE, LANE), lambda i: (i, 0))]
    if use_weight:
        out_shape.append(jax.ShapeDtypeStruct((out_rows, LANE), jnp.float32))
        out_specs.append(pl.BlockSpec((SUBLANE, LANE), lambda i: (i, 0)))

    in_bytes = total * (x2.dtype.itemsize + y2.dtype.itemsize)
    out_bytes = len(out_shape) * out_rows * LANE * 4
    cost = pl.CostEstimate(
        flops=(5 if use_weight else 3) * total,
        transcendentals=(total if use_weight else 0),
        bytes_accessed=in_bytes + out_bytes,
    )

    outs = pl.pallas_call(
        kernel,
        out_shape=tuple(out_shape),
        grid_spec=pltpu.PrefetchScalarGridSpec(
            num_scalar_prefetch=0,
            grid=(num_blocks,),
            in_specs=[
                pl.BlockSpec((tile_r, LANE), lambda i: (i, 0)),
                pl.BlockSpec((tile_r, LANE), lambda i: (i, 0)),
            ],
            out_specs=tuple(out_specs),
        ),
        compiler_params=pltpu.CompilerParams(
            dimension_semantics=("parallel",)),
        cost_estimate=cost,
    )(x2, y2)

    num = jnp.sum(outs[0])
    if use_weight:
        den = jnp.sum(outs[1])
        return num / den
    return num / jnp.float32(n_batch)


def _reference(x, y, use_weight):
    x = x.astype(jnp.float32)
    y = y.astype(jnp.float32)
    loss = (x - y) ** 2
    if use_weight:
        w = 1.0 / (y + 0.25)
        return jnp.sum(loss * w) / jnp.sum(w)
    return jnp.sum(loss) / y.shape[0]


if __name__ == "__main__":
    key = jax.random.PRNGKey(0)
    ok = True
    # (2,4,16,16): 1024-aligned, zero-copy path.  (2,3,15,15): ragged path
    # (pad + last-block mask).
    for shape in [(2, 4, 16, 16), (2, 3, 15, 15)]:
        kx, ky, key = jax.random.split(key, 3)
        x = jax.random.normal(kx, shape, dtype=jnp.float32)
        y = jax.random.uniform(ky, shape, dtype=jnp.float32)  # positive labels
        for use_weight in (False, True):
            out = jax.block_until_ready(l2_loss(x, y, use_weight=use_weight))
            ref = _reference(x, y, use_weight)
            if not jnp.allclose(out, ref, rtol=1e-5, atol=1e-5):
                ok = False
                print(f"MISMATCH shape={shape} use_weight={use_weight}: "
                      f"{out} vs {ref}")

    if ok:
        print("KERNEL_OK")
</pallas_src>

<mosaic_0001>
module attributes {stable_mosaic.version = 11 : i64} {
  func.func @_l2_partial_kernel(%arg0: i32, %arg1: memref<16x128xf32, #tpu.memory_space<vmem>>, %arg2: memref<16x128xf32, #tpu.memory_space<vmem>>, %arg3: memref<8x128xf32, #tpu.memory_space<vmem>>) attributes {dimension_semantics = [#tpu.dimension_semantics<parallel>], iteration_bounds = array<i64: 1>, scalar_prefetch = 0 : i64, scratch_operands = 0 : i64, tpu.core_type = #tpu.core_type<tc>, window_params = [{transform_indices = @transform_0, window_bounds = array<i64: 16, 128>}, {transform_indices = @transform_1, window_bounds = array<i64: 16, 128>}, {transform_indices = @transform_2, window_bounds = array<i64: 8, 128>}]} {
    %c0 = arith.constant 0 : index
    %c0_0 = arith.constant 0 : index
    %0 = vector.load %arg1[%c0, %c0_0] : memref<16x128xf32, #tpu.memory_space<vmem>>, vector<16x128xf32>
    %c0_1 = arith.constant 0 : index
    %c0_2 = arith.constant 0 : index
    %1 = vector.load %arg2[%c0_1, %c0_2] : memref<16x128xf32, #tpu.memory_space<vmem>>, vector<16x128xf32>
    %2 = arith.subf %0, %1 : vector<16x128xf32>
    %3 = arith.mulf %2, %2 : vector<16x128xf32>
    %4 = vector.shape_cast %3 : vector<16x128xf32> to vector<2x8x128xf32>
    %cst = arith.constant dense<0.000000e+00> : vector<8x128xf32>
    %5 = vector.multi_reduction <add>, %4, %cst [0] : vector<2x8x128xf32> to vector<8x128xf32>
    %c0_3 = arith.constant 0 : index
    %c0_4 = arith.constant 0 : index
    %6 = vector.load %arg3[%c0_3, %c0_4] : memref<8x128xf32, #tpu.memory_space<vmem>>, vector<8x128xf32>
    tpu.vector_store %arg3[%c0_3, %c0_4], %5 {strides = array<i32>} : memref<8x128xf32, #tpu.memory_space<vmem>>, vector<8x128xf32>,
    return
  }
  func.func @transform_0(%arg0: i32) -> (i32, i32) {
    %c0_i32 = arith.constant 0 : i32
    %c0_i32_0 = arith.constant 0 : i32
    return %arg0, %c0_i32 : i32, i32
  }
  func.func @transform_1(%arg0: i32) -> (i32, i32) {
    %c0_i32 = arith.constant 0 : i32
    %c0_i32_0 = arith.constant 0 : i32
    return %arg0, %c0_i32 : i32, i32
  }
  func.func @transform_2(%arg0: i32) -> (i32, i32) {
    %c0_i32 = arith.constant 0 : i32
    %c0_i32_0 = arith.constant 0 : i32
    return %arg0, %c0_i32 : i32, i32
  }
}

</mosaic_0001>

<llo_original>
// kernel: tpu_custom_call.1
$region0: #{tpu_custom_call.1}
  #allocation0 [shape = 'u32[]', space=smem, size = 0x4, offset = 0x4, fixed_abs, tag = 'smem constant byte address 0x4 - core index']
  #allocation1 [shape = 'u32[144,128]{1,0:T(1,128)}', space=vmem, size = 0x12000, scoped, tag = 'internal scratch']
  %s0 = inlined_call_operand.hbm [shape: f32[16,128], index: 0, kind: input, shape index: {}]
  %s1 = inlined_call_operand.hbm [shape: f32[16,128], index: 1, kind: input, shape index: {}]
  %s2 = inlined_call_operand.hbm [shape: f32[8,128], index: 2, kind: output, shape index: {}]
  %s3 = sld [smem:[#allocation0]]
  $region26: #{tpu_custom_call.1} parent=0
    _
  %s5 = ssub.s32 1, %s3
  %s6 = scalar_select 0, %s5, %s3
  $region1: #{tpu_custom_call.1} parent=0
    #allocation2 [shape = 'u8[8192]{0}', space=vmem, size = 0x2000, scoped, tag = 'input window, operand 0, single buffered']
    #allocation3 [shape = 's32[1]{0}', space=sflag, size = 0x4, scoped, tag = 'scoped memory for tpu_custom_call.1']
    #allocation4 [shape = 's32[1]{0}', space=sflag, size = 0x4, scoped, tag = 'scoped memory for tpu_custom_call.1']
    #allocation5 [shape = 'u8[8192]{0}', space=vmem, size = 0x2000, scoped, tag = 'input window, operand 1, single buffered']
    #allocation6 [shape = 's32[1]{0}', space=sflag, size = 0x4, scoped, tag = 'scoped memory for tpu_custom_call.1']
    #allocation7 [shape = 'u8[4096]{0}', space=vmem, size = 0x1000, scoped, tag = 'output window, operand 0, single buffered']
    %7 = vsyncpa [#allocation3], 0
    %8 = vsyncpa [#allocation6], 0
    %9 = vsyncpa [#allocation4], 0
    // Predicated region
    $region2: #{tpu_custom_call.1} parent=1 // pred_check
      _
    $region3: #{tpu_custom_call.1} parent=1 // pred_check_branch
      %11 = sbr.rel (0) target = $region5
    $region4: #{tpu_custom_call.1} parent=1 // pred_region
      %s13 = ssub.s32 256, 256
      %14 = vsyncadd [#allocation3], %s13
      %s15 = sshll.u32 [#allocation2], 4
      %s16 = int_to_ptr.vmem [resolvable:$true] %s15
      %21 = dma.hbm_to_vmem [thread:$0]  %s0, 256, %s16, [#allocation3], 128, 128, 8
    $region5: #{tpu_custom_call.1} parent=1 // pred_fallthru
      _
    // Predicated region
    $region6: #{tpu_custom_call.1} parent=1 // pred_check
      _
    $region7: #{tpu_custom_call.1} parent=1 // pred_check_branch
      %23 = sbr.rel (0) target = $region9
    $region8: #{tpu_custom_call.1} parent=1 // pred_region
      %s25 = ssub.s32 256, 256
      %26 = vsyncadd [#allocation6], %s25
      %s27 = sshll.u32 [#allocation5], 4
      %s28 = int_to_ptr.vmem [resolvable:$true] %s27
      %33 = dma.hbm_to_vmem [thread:$0]  %s1, 256, %s28, [#allocation6], 128, 128, 8
    $region9: #{tpu_custom_call.1} parent=1 // pred_fallthru
      _
    // Predicated region
    $region10: #{tpu_custom_call.1} parent=1 // pred_check
      _
    $region11: #{tpu_custom_call.1} parent=1 // pred_check_branch
      %35 = sbr.rel (0) target = $region13
    $region12: #{tpu_custom_call.1} parent=1 // pred_region
      %36 = dma.done [#allocation3], 256
    $region13: #{tpu_custom_call.1} parent=1 // pred_fallthru
      _
    // Predicated region
    $region14: #{tpu_custom_call.1} parent=1 // pred_check
      _
    $region15: #{tpu_custom_call.1} parent=1 // pred_check_branch
      %38 = sbr.rel (0) target = $region17
    $region16: #{tpu_custom_call.1} parent=1 // pred_region
      %39 = dma.done [#allocation6], 256
    $region17: #{tpu_custom_call.1} parent=1 // pred_fallthru
      _
    %v40 = vld [vmem:[#allocation2] sm:$0xff]
    %v41 = vld [vmem:[#allocation2 + $0x8] sm:$0xff]
    %v42 = vld [vmem:[#allocation5] sm:$0xff]
    %v43 = vld [vmem:[#allocation5 + $0x8] sm:$0xff]
    %v44 = vsub.f32 %v40, %v42
    %v45 = vsub.f32 %v41, %v43
    %v46 = vmul.f32 %v44, %v44
    %v47 = vmul.f32 %v45, %v45
    %v48 = vadd.f32 %v46, %v47
    %49 = vst [vmem:[#allocation7] sm:$0xff] %v48
    // Predicated region
    $region18: #{tpu_custom_call.1} parent=1 // pred_check
      _
    $region19: #{tpu_custom_call.1} parent=1 // pred_check_branch
      %51 = sbr.rel (0) target = $region21
    $region20: #{tpu_custom_call.1} parent=1 // pred_region
      %s53 = ssub.s32 128, 128
      %54 = vsyncadd [#allocation4], %s53
      %s56 = sshll.u32 [#allocation7], 4
      %s57 = int_to_ptr.vmem [resolvable:$true] %s56
      %59 = dma.vmem_to_hbm [thread:$0]  %s57, 128, %s2, [#allocation4]
    $region21: #{tpu_custom_call.1} parent=1 // pred_fallthru
      _
    // Predicated region
    $region22: #{tpu_custom_call.1} parent=1 // pred_check
      _
    $region23: #{tpu_custom_call.1} parent=1 // pred_check_branch
      %61 = sbr.rel (0) target = $region25
    $region24: #{tpu_custom_call.1} parent=1 // pred_region
      %62 = dma.done [#allocation4], 128
    $region25: #{tpu_custom_call.1} parent=1 // pred_fallthru
      _
    %63 = vsyncpa [#allocation3], 1
    %64 = vsyncpa [#allocation6], 1
    %65 = vsyncpa [#allocation4], 1

</llo_original>
